<compile_context>
chip_gen: v5e
topology: v5e:2x2
jax: 0.10.0
libtpu: 0.0.40
codegen_flags: <defaults>
</compile_context>

<pallas_src>
import functools

import jax
import jax.numpy as jnp
from jax.experimental import pallas as pl
from jax.experimental.pallas import tpu as pltpu


def _round_up(n, m):
    return ((n + m - 1) // m) * m


def _timepara_kernel(x_ref,
                     w1_ref, b1_ref,
                     w2_ref, b2_ref,
                     wh_ref, bh_ref,
                     weight_ref, bias_ref,
                     *, output_dim):
    # Cast activations to the weight dtype (bf16) so the MXU runs at native
    # throughput; accumulation is forced to f32; elementwise math stays f32.
    x = x_ref[...].astype(w1_ref.dtype)

    # linear1 + relu
    h = jnp.dot(x, w1_ref[...], preferred_element_type=jnp.float32) + b1_ref[...]
    h = jnp.maximum(h, 0.0)

    # linear2 + relu  (hidden_drop is identity in eval mode)
    h = jnp.dot(h.astype(w2_ref.dtype), w2_ref[...],
                preferred_element_type=jnp.float32) + b2_ref[...]
    h = jnp.maximum(h, 0.0)

    # Fused output heads: [block_m, head_pad] = h @ [hidden_pad, head_pad];
    # weight lives in lanes [0, output_dim), bias in [output_dim, 2*output_dim).
    heads = jnp.dot(h.astype(wh_ref.dtype), wh_ref[...],
                    preferred_element_type=jnp.float32) + bh_ref[...]

    w_part = heads[:, :output_dim]
    b_part = heads[:, output_dim:2 * output_dim]
    weight_ref[...] = w_part * w_part + 1e-7   # f32, so the epsilon survives
    bias_ref[...] = b_part


def _choose_batch_tile(B, block_m):
    """Batch tile: multiple of 8, <= block_m, and giving >= 2 grid steps when
    possible so the parallel batch axis can use both v7x TensorCores."""
    if B <= 8:
        return B                                   # full-dim tile (legal)
    two_step = _round_up(-(-B // 2), 8)            # ceil(B/2), sublane-aligned
    tm = min(block_m, two_step)
    return tm if tm < B else B


def timepara_rnn_forward(x, prep, flownum, flowlen, *, block_m=512):
    """x: [B, input_dim] float32, prep: prepared (padded/fused/bf16) params.

    Returns (weight, bias), each [B, flownum, flowlen] float32.
    """
    B, input_dim = x.shape
    output_dim = flownum * flowlen
    assert block_m % 8 == 0

    tm = _choose_batch_tile(B, block_m)
    grid = (pl.cdiv(B, tm),)

    def resident(shape):
        # Whole-array, constant index_map -> stays in VMEM, no re-DMA per step.
        return pl.BlockSpec(shape, lambda i: (0,) * len(shape))

    weight, bias = pl.pallas_call(
        functools.partial(_timepara_kernel, output_dim=output_dim),
        grid=grid,
        in_specs=[
            pl.BlockSpec((tm, input_dim), lambda i: (i, 0)),   # x batch tile
            resident(prep["w1"].shape), resident(prep["b1"].shape),
            resident(prep["w2"].shape), resident(prep["b2"].shape),
            resident(prep["wh"].shape), resident(prep["bh"].shape),
        ],
        out_specs=[
            pl.BlockSpec((tm, output_dim), lambda i: (i, 0)),  # weight head
            pl.BlockSpec((tm, output_dim), lambda i: (i, 0)),  # bias head
        ],
        out_shape=(
            jax.ShapeDtypeStruct((B, output_dim), jnp.float32),
            jax.ShapeDtypeStruct((B, output_dim), jnp.float32),
        ),
        compiler_params=pltpu.CompilerParams(
            dimension_semantics=("parallel",)),
    )(x, prep["w1"], prep["b1"], prep["w2"], prep["b2"], prep["wh"], prep["bh"])

    # Pure layout plumbing: row-major contiguous reshapes (no slab re-read).
    weight = weight.reshape(B, flownum, flowlen)
    bias = bias.reshape(B, flownum, flowlen)
    return weight, bias


def init_params(key, input_dim, hidden_dim, output_dim):
    """Logical f32 params (shapes match the nn.Linear layers, pre-transposed).

    Weights are stored as [in_features, out_features], biases as [1, out].
    """
    ks = jax.random.split(key, 8)

    def lin(kw, kb, fan_in, fan_out):
        bound = 1.0 / jnp.sqrt(fan_in)
        w = jax.random.uniform(kw, (fan_in, fan_out), jnp.float32, -bound, bound)
        b = jax.random.uniform(kb, (1, fan_out), jnp.float32, -bound, bound)
        return w, b

    w1, b1 = lin(ks[0], ks[1], input_dim, hidden_dim)     # linear1
    w2, b2 = lin(ks[2], ks[3], hidden_dim, hidden_dim)    # linear2
    ww, wb = lin(ks[4], ks[5], hidden_dim, output_dim)    # linear_weight
    bw, bb = lin(ks[6], ks[7], hidden_dim, output_dim)    # linear_bias
    return {"w1": w1, "b1": b1, "w2": w2, "b2": b2,
            "ww": ww, "wb": wb, "bw": bw, "bb": bb}


def prepare_params(params, hidden_dim, output_dim, compute_dtype=jnp.bfloat16):
    """One-time prep: pad hidden/head dims to 128 lanes, fuse heads, cast to bf16.

    Zero-padding is exact: padded hidden units see zero weights + zero bias and
    relu(0) = 0; padded head columns are never read back (kernel slices them off).
    NOTE: bf16 matmul operands introduce ~1e-3 relative drift vs a PyTorch f32
    module; pass compute_dtype=jnp.float32 for bit-closer (slower) matmuls.
    """
    hidden_pad = _round_up(hidden_dim, 128)
    head_pad = _round_up(2 * output_dim, 128)

    def pad2(a, rows, cols):
        return jnp.pad(a, ((0, rows - a.shape[0]), (0, cols - a.shape[1])))

    input_dim = params["w1"].shape[0]
    w1 = pad2(params["w1"], input_dim, hidden_pad).astype(compute_dtype)
    b1 = pad2(params["b1"], 1, hidden_pad)                      # f32 biases
    w2 = pad2(params["w2"], hidden_pad, hidden_pad).astype(compute_dtype)
    b2 = pad2(params["b2"], 1, hidden_pad)
    # Fused heads: [hidden, 2*output_dim] -> padded to [hidden_pad, head_pad].
    wh = jnp.concatenate([params["ww"], params["bw"]], axis=1)
    wh = pad2(wh, hidden_pad, head_pad).astype(compute_dtype)
    bh = jnp.concatenate([params["wb"], params["bb"]], axis=1)
    bh = pad2(bh, 1, head_pad)
    return {"w1": w1, "b1": b1, "w2": w2, "b2": b2, "wh": wh, "bh": bh}


def reference_forward(x, prep, flownum, flowlen):
    """Pure-JAX reference using the same prepared (bf16/padded/fused) params."""
    output_dim = flownum * flowlen
    cd = prep["w1"].dtype
    h = jnp.maximum(
        jnp.dot(x.astype(cd), prep["w1"], preferred_element_type=jnp.float32)
        + prep["b1"], 0.0)
    h = jnp.maximum(
        jnp.dot(h.astype(cd), prep["w2"], preferred_element_type=jnp.float32)
        + prep["b2"], 0.0)
    heads = jnp.dot(h.astype(cd), prep["wh"],
                    preferred_element_type=jnp.float32) + prep["bh"]
    w = heads[:, :output_dim].reshape(-1, flownum, flowlen) ** 2 + 1e-7
    b = heads[:, output_dim:2 * output_dim].reshape(-1, flownum, flowlen)
    return w, b


if __name__ == "__main__":
    # Small shapes consistent with the module; batch chosen so the grid has
    # >= 2 steps (tile selection gives tm=128, grid=(2,)) and the pipeline /
    # megacore path is exercised.
    batch = 256
    input_dim = 4
    hidden_dim = 32
    flownum = 2
    flowlen = 8
    output_dim = flownum * flowlen  # 16 (required for the .view() to be per-sample)

    key = jax.random.PRNGKey(0)
    k_x, k_p = jax.random.split(key)
    x = jax.random.normal(k_x, (batch, input_dim), dtype=jnp.float32)
    params = init_params(k_p, input_dim, hidden_dim, output_dim)
    prep = prepare_params(params, hidden_dim, output_dim)

    fwd = jax.jit(timepara_rnn_forward, static_argnums=(2, 3))
    weight, bias = fwd(x, prep, flownum, flowlen)
    weight, bias = jax.block_until_ready((weight, bias))

    # Correctness check against a pure-JAX reference using the same params.
    w_ref, b_ref = reference_forward(x, prep, flownum, flowlen)
    assert weight.shape == (batch, flownum, flowlen)
    assert bias.shape == (batch, flownum, flowlen)
    assert jnp.allclose(weight, w_ref, atol=1e-3, rtol=1e-3)
    assert jnp.allclose(bias, b_ref, atol=1e-3, rtol=1e-3)

    print("KERNEL_OK")
</pallas_src>

<mosaic_0001>
module attributes {stable_mosaic.version = 11 : i64} {
  func.func @_timepara_kernel(%arg0: i32, %arg1: memref<128x4xf32, #tpu.memory_space<vmem>>, %arg2: memref<4x128xbf16, #tpu.memory_space<vmem>>, %arg3: memref<1x128xf32, #tpu.memory_space<vmem>>, %arg4: memref<128x128xbf16, #tpu.memory_space<vmem>>, %arg5: memref<1x128xf32, #tpu.memory_space<vmem>>, %arg6: memref<128x128xbf16, #tpu.memory_space<vmem>>, %arg7: memref<1x128xf32, #tpu.memory_space<vmem>>, %arg8: memref<128x16xf32, #tpu.memory_space<vmem>>, %arg9: memref<128x16xf32, #tpu.memory_space<vmem>>) attributes {dimension_semantics = [#tpu.dimension_semantics<parallel>], iteration_bounds = array<i64: 2>, scalar_prefetch = 0 : i64, scratch_operands = 0 : i64, tpu.core_type = #tpu.core_type<tc>, window_params = [{transform_indices = @transform_0, window_bounds = array<i64: 128, 4>}, {pipeline_mode = #tpu.pipeline_mode<synchronous>, transform_indices = @transform_1, window_bounds = array<i64: 4, 128>}, {pipeline_mode = #tpu.pipeline_mode<synchronous>, transform_indices = @transform_2, window_bounds = array<i64: 1, 128>}, {pipeline_mode = #tpu.pipeline_mode<synchronous>, transform_indices = @transform_3, window_bounds = array<i64: 128, 128>}, {pipeline_mode = #tpu.pipeline_mode<synchronous>, transform_indices = @transform_4, window_bounds = array<i64: 1, 128>}, {pipeline_mode = #tpu.pipeline_mode<synchronous>, transform_indices = @transform_5, window_bounds = array<i64: 128, 128>}, {pipeline_mode = #tpu.pipeline_mode<synchronous>, transform_indices = @transform_6, window_bounds = array<i64: 1, 128>}, {transform_indices = @transform_7, window_bounds = array<i64: 128, 16>}, {transform_indices = @transform_8, window_bounds = array<i64: 128, 16>}]} {
    %c0 = arith.constant 0 : index
    %c0_0 = arith.constant 0 : index
    %0 = vector.load %arg1[%c0, %c0_0] : memref<128x4xf32, #tpu.memory_space<vmem>>, vector<128x4xf32>
    %1 = arith.truncf %0 : vector<128x4xf32> to vector<128x4xbf16>
    %c0_1 = arith.constant 0 : index
    %c0_2 = arith.constant 0 : index
    %2 = vector.load %arg2[%c0_1, %c0_2] : memref<4x128xbf16, #tpu.memory_space<vmem>>, vector<4x128xbf16>
    %cst = arith.constant dense<0.000000e+00> : vector<128x128xf32>
    %3 = tpu.matmul %1, %2, %cst {dimension_numbers = #tpu.dot_dimension_numbers<[1], [0], [0], [1], [0, 0, 1, 1], [], []>} : vector<128x4xbf16>, vector<4x128xbf16>, vector<128x128xf32> -> vector<128x128xf32>
    %c0_3 = arith.constant 0 : index
    %c0_4 = arith.constant 0 : index
    %4 = vector.load %arg3[%c0_3, %c0_4] : memref<1x128xf32, #tpu.memory_space<vmem>>, vector<1x128xf32>
    %5 = vector.broadcast %4 : vector<1x128xf32> to vector<128x128xf32>
    %6 = arith.addf %3, %5 : vector<128x128xf32>
    %cst_5 = arith.constant 0.000000e+00 : f32
    %7 = vector.broadcast %cst_5 : f32 to vector<128x128xf32>
    %8 = arith.maximumf %6, %7 : vector<128x128xf32>
    %9 = arith.truncf %8 : vector<128x128xf32> to vector<128x128xbf16>
    %c0_6 = arith.constant 0 : index
    %c0_7 = arith.constant 0 : index
    %10 = vector.load %arg4[%c0_6, %c0_7] : memref<128x128xbf16, #tpu.memory_space<vmem>>, vector<128x128xbf16>
    %cst_8 = arith.constant dense<0.000000e+00> : vector<128x128xf32>
    %11 = tpu.matmul %9, %10, %cst_8 {dimension_numbers = #tpu.dot_dimension_numbers<[1], [0], [0], [1], [0, 0, 1, 1], [], []>} : vector<128x128xbf16>, vector<128x128xbf16>, vector<128x128xf32> -> vector<128x128xf32>
    %c0_9 = arith.constant 0 : index
    %c0_10 = arith.constant 0 : index
    %12 = vector.load %arg5[%c0_9, %c0_10] : memref<1x128xf32, #tpu.memory_space<vmem>>, vector<1x128xf32>
    %13 = vector.broadcast %12 : vector<1x128xf32> to vector<128x128xf32>
    %14 = arith.addf %11, %13 : vector<128x128xf32>
    %cst_11 = arith.constant 0.000000e+00 : f32
    %15 = vector.broadcast %cst_11 : f32 to vector<128x128xf32>
    %16 = arith.maximumf %14, %15 : vector<128x128xf32>
    %17 = arith.truncf %16 : vector<128x128xf32> to vector<128x128xbf16>
    %c0_12 = arith.constant 0 : index
    %c0_13 = arith.constant 0 : index
    %18 = vector.load %arg6[%c0_12, %c0_13] : memref<128x128xbf16, #tpu.memory_space<vmem>>, vector<128x128xbf16>
    %cst_14 = arith.constant dense<0.000000e+00> : vector<128x128xf32>
    %19 = tpu.matmul %17, %18, %cst_14 {dimension_numbers = #tpu.dot_dimension_numbers<[1], [0], [0], [1], [0, 0, 1, 1], [], []>} : vector<128x128xbf16>, vector<128x128xbf16>, vector<128x128xf32> -> vector<128x128xf32>
    %c0_15 = arith.constant 0 : index
    %c0_16 = arith.constant 0 : index
    %20 = vector.load %arg7[%c0_15, %c0_16] : memref<1x128xf32, #tpu.memory_space<vmem>>, vector<1x128xf32>
    %21 = vector.broadcast %20 : vector<1x128xf32> to vector<128x128xf32>
    %22 = arith.addf %19, %21 : vector<128x128xf32>
    %23 = vector.extract_strided_slice %22 {offsets = [0, 0], sizes = [128, 16], strides = [1, 1]} : vector<128x128xf32> to vector<128x16xf32>
    %24 = vector.extract_strided_slice %22 {offsets = [0, 16], sizes = [128, 16], strides = [1, 1]} : vector<128x128xf32> to vector<128x16xf32>
    %25 = arith.mulf %23, %23 : vector<128x16xf32>
    %cst_17 = arith.constant 1.000000e-07 : f32
    %26 = vector.broadcast %cst_17 : f32 to vector<128x16xf32>
    %27 = arith.addf %25, %26 : vector<128x16xf32>
    %c0_18 = arith.constant 0 : index
    %c0_19 = arith.constant 0 : index
    %28 = vector.load %arg8[%c0_18, %c0_19] : memref<128x16xf32, #tpu.memory_space<vmem>>, vector<128x16xf32>
    tpu.vector_store %arg8[%c0_18, %c0_19], %27 {strides = array<i32>} : memref<128x16xf32, #tpu.memory_space<vmem>>, vector<128x16xf32>,
    %c0_20 = arith.constant 0 : index
    %c0_21 = arith.constant 0 : index
    %29 = vector.load %arg9[%c0_20, %c0_21] : memref<128x16xf32, #tpu.memory_space<vmem>>, vector<128x16xf32>
    tpu.vector_store %arg9[%c0_20, %c0_21], %24 {strides = array<i32>} : memref<128x16xf32, #tpu.memory_space<vmem>>, vector<128x16xf32>,
    return
  }
  func.func @transform_0(%arg0: i32) -> (i32, i32) {
    %c0_i32 = arith.constant 0 : i32
    %c0_i32_0 = arith.constant 0 : i32
    return %arg0, %c0_i32 : i32, i32
  }
  func.func @transform_1(%arg0: i32) -> (i32, i32) {
    %c0_i32 = arith.constant 0 : i32
    %c0_i32_0 = arith.constant 0 : i32
    %c0_i32_1 = arith.constant 0 : i32
    return %c0_i32, %c0_i32_0 : i32, i32
  }
  func.func @transform_2(%arg0: i32) -> (i32, i32) {
    %c0_i32 = arith.constant 0 : i32
    %c0_i32_0 = arith.constant 0 : i32
    %c0_i32_1 = arith.constant 0 : i32
    return %c0_i32, %c0_i32_0 : i32, i32
  }
  func.func @transform_3(%arg0: i32) -> (i32, i32) {
    %c0_i32 = arith.constant 0 : i32
    %c0_i32_0 = arith.constant 0 : i32
    %c0_i32_1 = arith.constant 0 : i32
    return %c0_i32, %c0_i32_0 : i32, i32
  }
  func.func @transform_4(%arg0: i32) -> (i32, i32) {
    %c0_i32 = arith.constant 0 : i32
    %c0_i32_0 = arith.constant 0 : i32
    %c0_i32_1 = arith.constant 0 : i32
    return %c0_i32, %c0_i32_0 : i32, i32
  }
  func.func @transform_5(%arg0: i32) -> (i32, i32) {
    %c0_i32 = arith.constant 0 : i32
    %c0_i32_0 = arith.constant 0 : i32
    %c0_i32_1 = arith.constant 0 : i32
    return %c0_i32, %c0_i32_0 : i32, i32
  }
  func.func @transform_6(%arg0: i32) -> (i32, i32) {
    %c0_i32 = arith.constant 0 : i32
    %c0_i32_0 = arith.constant 0 : i32
    %c0_i32_1 = arith.constant 0 : i32
    return %c0_i32, %c0_i32_0 : i32, i32
  }
  func.func @transform_7(%arg0: i32) -> (i32, i32) {
    %c0_i32 = arith.constant 0 : i32
    %c0_i32_0 = arith.constant 0 : i32
    return %arg0, %c0_i32 : i32, i32
  }
  func.func @transform_8(%arg0: i32) -> (i32, i32) {
    %c0_i32 = arith.constant 0 : i32
    %c0_i32_0 = arith.constant 0 : i32
    return %arg0, %c0_i32 : i32, i32
  }
}

</mosaic_0001>

<llo_original>
// kernel: timepara_rnn_forward.1
$region0: #{timepara_rnn_forward.1}
  #allocation0 [shape = 'u32[]', space=smem, size = 0x4, offset = 0x4, fixed_abs, tag = 'smem constant byte address 0x4 - core index']
  #allocation1 [shape = 'u32[72,128]{1,0:T(1,128)}', space=vmem, size = 0x9000, scoped, tag = 'internal scratch']
  %s0 = inlined_call_operand.vmem [shape: f32[256,4], index: 0, kind: input, shape index: {}]
  %s1 = inlined_call_operand.vmem [shape: bf16[4,128], index: 1, kind: input, shape index: {}]
  %s2 = inlined_call_operand.vmem [shape: f32[1,128], index: 2, kind: input, shape index: {}]
  %s3 = inlined_call_operand.vmem [shape: bf16[128,128], index: 3, kind: input, shape index: {}]
  %s4 = inlined_call_operand.vmem [shape: f32[1,128], index: 4, kind: input, shape index: {}]
  %s5 = inlined_call_operand.vmem [shape: bf16[128,128], index: 5, kind: input, shape index: {}]
  %s6 = inlined_call_operand.vmem [shape: f32[1,128], index: 6, kind: input, shape index: {}]
  %s7 = inlined_call_operand.vmem [shape: f32[256,16], index: 7, kind: output, shape index: {0}]
  %s8 = inlined_call_operand.vmem [shape: f32[256,16], index: 8, kind: output, shape index: {1}]
  %9 = xla_tuple %s7, %s8
  %s10 = sld [smem:[#allocation0]]
  $region69: #{timepara_rnn_forward.1} parent=0
    _
  %s12 = ssub.s32 1, %s10
  %s13 = scalar_select 0, %s12, %s10
  loop: start=0, step=1, limit=4
  $region2: #{timepara_rnn_forward.1} parent=0 // loop_pre_header
    _
  $region3: #{timepara_rnn_forward.1} parent=0 // loop_header
    %s15 = sphi 0, %s19
    %p16 = scmp.ge.s32.totalorder %s15, 4
    %s25 = sphi 0, %s27
    %s28 = sphi 0, %s25
    %s29 = sphi 0, %s28
    %s45 = sphi 0, %s29
    %s49 = sphi 0, %s49
    %s51 = sphi 0, %s49
    %s52 = sphi 0, %s51
    %s66 = sphi 0, %s52
    %s70 = sphi 0, %s70
    %s72 = sphi 0, %s70
    %s73 = sphi 0, %s72
    %s87 = sphi 0, %s73
    %s91 = sphi 0, %s91
    %s93 = sphi 0, %s91
    %s94 = sphi 0, %s93
    %s108 = sphi 0, %s94
    %s112 = sphi 0, %s112
    %s114 = sphi 0, %s112
    %s115 = sphi 0, %s114
    %s129 = sphi 0, %s115
    %s133 = sphi 0, %s133
    %s135 = sphi 0, %s133
    %s136 = sphi 0, %s135
    %s150 = sphi 0, %s136
    %s154 = sphi 0, %s154
    %s156 = sphi 0, %s154
    %s157 = sphi 0, %s156
    %s171 = sphi 0, %s157
    %s177 = sphi 0, %s179
    %s180 = sphi 0, %s177
    %s181 = sphi 0, %s180
    %s197 = sphi 0, %s181
    %s203 = sphi 0, %s205
    %s206 = sphi 0, %s203
    %s207 = sphi 0, %s206
    %s223 = sphi 0, %s207
  $region4: #{timepara_rnn_forward.1} parent=0 // loop_header_branch
    %18 = sbr.rel (%p16) target = $region8
  $region5: #{timepara_rnn_forward.1} parent=0 // loop_body
    %s20 = ssub.s32 %s15, 1
    %s21 = ssub.s32 %s15, 2
    %s22 = sadd.s32 %s15, 1
    %s23 = ssub.s32 %s15, %s22
    %p24 = scmp.eq.s32.totalorder %s23, 0
    %s26 = sadd.s32 %s25, 1
    %s27 = scalar_select %p24, %s25, %s26
    %p30 = pneg %p24
    %p31 = scmp.eq.s32.totalorder %s15, 1
    %p32 = por %p30, %p31
    %p33 = scmp.ne.s32.totalorder %s25, %s28
    %p34 = scmp.eq.s32.totalorder %s15, 0
    %p35 = por %p33, %p34
    %p36 = scmp.ne.s32.totalorder %s25, %s28
    %p37 = scmp.eq.s32.totalorder %s20, 1
    %p38 = por %p36, %p37
    %p39 = scmp.ne.s32.totalorder %s28, %s29
    %p40 = scmp.eq.s32.totalorder %s20, 0
    %p41 = por %p39, %p40
    %p42 = scmp.ne.s32.totalorder %s28, %s29
    %p43 = scmp.eq.s32.totalorder %s21, 1
    %p44 = por %p42, %p43
    %p46 = scmp.ne.s32.totalorder %s29, %s45
    %p47 = scmp.eq.s32.totalorder %s21, 0
    %p48 = por %p46, %p47
    %s50 = sadd.s32 %s49, 1
    %p53 = scmp.eq.s32.totalorder %s15, 1
    %p54 = scmp.ne.s32.totalorder %s49, %s51
    %p55 = scmp.eq.s32.totalorder %s15, 0
    %p56 = por %p54, %p55
    %p57 = scmp.ne.s32.totalorder %s49, %s51
    %p58 = scmp.eq.s32.totalorder %s20, 1
    %p59 = por %p57, %p58
    %p60 = scmp.ne.s32.totalorder %s51, %s52
    %p61 = scmp.eq.s32.totalorder %s20, 0
    %p62 = por %p60, %p61
    %p63 = scmp.ne.s32.totalorder %s51, %s52
    %p64 = scmp.eq.s32.totalorder %s21, 1
    %p65 = por %p63, %p64
    %p67 = scmp.ne.s32.totalorder %s52, %s66
    %p68 = scmp.eq.s32.totalorder %s21, 0
    %p69 = por %p67, %p68
    %s71 = sadd.s32 %s70, 1
    %p74 = scmp.eq.s32.totalorder %s15, 1
    %p75 = scmp.ne.s32.totalorder %s70, %s72
    %p76 = scmp.eq.s32.totalorder %s15, 0
    %p77 = por %p75, %p76
    %p78 = scmp.ne.s32.totalorder %s70, %s72
    %p79 = scmp.eq.s32.totalorder %s20, 1
    %p80 = por %p78, %p79
    %p81 = scmp.ne.s32.totalorder %s72, %s73
    %p82 = scmp.eq.s32.totalorder %s20, 0
    %p83 = por %p81, %p82
    %p84 = scmp.ne.s32.totalorder %s72, %s73
    %p85 = scmp.eq.s32.totalorder %s21, 1
    %p86 = por %p84, %p85
    %p88 = scmp.ne.s32.totalorder %s73, %s87
    %p89 = scmp.eq.s32.totalorder %s21, 0
    %p90 = por %p88, %p89
    %s92 = sadd.s32 %s91, 1
    %p95 = scmp.eq.s32.totalorder %s15, 1
    %p96 = scmp.ne.s32.totalorder %s91, %s93
    %p97 = scmp.eq.s32.totalorder %s15, 0
    %p98 = por %p96, %p97
    %p99 = scmp.ne.s32.totalorder %s91, %s93
    %p100 = scmp.eq.s32.totalorder %s20, 1
    %p101 = por %p99, %p100
    %p102 = scmp.ne.s32.totalorder %s93, %s94
    %p103 = scmp.eq.s32.totalorder %s20, 0
    %p104 = por %p102, %p103
    %p105 = scmp.ne.s32.totalorder %s93, %s94
    %p106 = scmp.eq.s32.totalorder %s21, 1
    %p107 = por %p105, %p106
    %p109 = scmp.ne.s32.totalorder %s94, %s108
    %p110 = scmp.eq.s32.totalorder %s21, 0
    %p111 = por %p109, %p110
    %s113 = sadd.s32 %s112, 1
    %p116 = scmp.eq.s32.totalorder %s15, 1
    %p117 = scmp.ne.s32.totalorder %s112, %s114
    %p118 = scmp.eq.s32.totalorder %s15, 0
    %p119 = por %p117, %p118
    %p120 = scmp.ne.s32.totalorder %s112, %s114
    %p121 = scmp.eq.s32.totalorder %s20, 1
    %p122 = por %p120, %p121
    %p123 = scmp.ne.s32.totalorder %s114, %s115
    %p124 = scmp.eq.s32.totalorder %s20, 0
    %p125 = por %p123, %p124
    %p126 = scmp.ne.s32.totalorder %s114, %s115
    %p127 = scmp.eq.s32.totalorder %s21, 1
    %p128 = por %p126, %p127
    %p130 = scmp.ne.s32.totalorder %s115, %s129
    %p131 = scmp.eq.s32.totalorder %s21, 0
    %p132 = por %p130, %p131
    %s134 = sadd.s32 %s133, 1
    %p137 = scmp.eq.s32.totalorder %s15, 1
    %p138 = scmp.ne.s32.totalorder %s133, %s135
    %p139 = scmp.eq.s32.totalorder %s15, 0
    %p140 = por %p138, %p139
    %p141 = scmp.ne.s32.totalorder %s133, %s135
    %p142 = scmp.eq.s32.totalorder %s20, 1
    %p143 = por %p141, %p142
    %p144 = scmp.ne.s32.totalorder %s135, %s136
    %p145 = scmp.eq.s32.totalorder %s20, 0
    %p146 = por %p144, %p145
    %p147 = scmp.ne.s32.totalorder %s135, %s136
    %p148 = scmp.eq.s32.totalorder %s21, 1
    %p149 = por %p147, %p148
    %p151 = scmp.ne.s32.totalorder %s136, %s150
    %p152 = scmp.eq.s32.totalorder %s21, 0
    %p153 = por %p151, %p152
    %s155 = sadd.s32 %s154, 1
    %p158 = scmp.eq.s32.totalorder %s15, 1
    %p159 = scmp.ne.s32.totalorder %s154, %s156
    %p160 = scmp.eq.s32.totalorder %s15, 0
    %p161 = por %p159, %p160
    %p162 = scmp.ne.s32.totalorder %s154, %s156
    %p163 = scmp.eq.s32.totalorder %s20, 1
    %p164 = por %p162, %p163
    %p165 = scmp.ne.s32.totalorder %s156, %s157
    %p166 = scmp.eq.s32.totalorder %s20, 0
    %p167 = por %p165, %p166
    %p168 = scmp.ne.s32.totalorder %s156, %s157
    %p169 = scmp.eq.s32.totalorder %s21, 1
    %p170 = por %p168, %p169
    %p172 = scmp.ne.s32.totalorder %s157, %s171
    %p173 = scmp.eq.s32.totalorder %s21, 0
    %p174 = por %p172, %p173
    %s175 = ssub.s32 %s15, %s22
    %p176 = scmp.eq.s32.totalorder %s175, 0
    %s178 = sadd.s32 %s177, 1
    %s179 = scalar_select %p176, %s177, %s178
    %p182 = pneg %p176
    %p183 = scmp.eq.s32.totalorder %s15, 1
    %p184 = por %p182, %p183
    %p185 = scmp.ne.s32.totalorder %s177, %s180
    %p186 = scmp.eq.s32.totalorder %s15, 0
    %p187 = por %p185, %p186
    %p188 = scmp.ne.s32.totalorder %s177, %s180
    %p189 = scmp.eq.s32.totalorder %s20, 1
    %p190 = por %p188, %p189
    %p191 = scmp.ne.s32.totalorder %s180, %s181
    %p192 = scmp.eq.s32.totalorder %s20, 0
    %p193 = por %p191, %p192
    %p194 = scmp.ne.s32.totalorder %s180, %s181
    %p195 = scmp.eq.s32.totalorder %s21, 1
    %p196 = por %p194, %p195
    %p198 = scmp.ne.s32.totalorder %s181, %s197
    %p199 = scmp.eq.s32.totalorder %s21, 0
    %p200 = por %p198, %p199
    %s201 = ssub.s32 %s15, %s22
    %p202 = scmp.eq.s32.totalorder %s201, 0
    %s204 = sadd.s32 %s203, 1
    %s205 = scalar_select %p202, %s203, %s204
    %p208 = pneg %p202
    %p209 = scmp.eq.s32.totalorder %s15, 1
    %p210 = por %p208, %p209
    %p211 = scmp.ne.s32.totalorder %s203, %s206
    %p212 = scmp.eq.s32.totalorder %s15, 0
    %p213 = por %p211, %p212
    %p214 = scmp.ne.s32.totalorder %s203, %s206
    %p215 = scmp.eq.s32.totalorder %s20, 1
    %p216 = por %p214, %p215
    %p217 = scmp.ne.s32.totalorder %s206, %s207
    %p218 = scmp.eq.s32.totalorder %s20, 0
    %p219 = por %p217, %p218
    %p220 = scmp.ne.s32.totalorder %s206, %s207
    %p221 = scmp.eq.s32.totalorder %s21, 1
    %p222 = por %p220, %p221
    %p224 = scmp.ne.s32.totalorder %s207, %s223
    %p225 = scmp.eq.s32.totalorder %s21, 0
    %p226 = por %p224, %p225
    %p227 = scmp.le.s32.totalorder 1, %s15
    %p228 = scmp.lt.s32.totalorder %s15, 3
    %p229 = pnand %p227, %p228
    %p230 = pneg %p229
    // Predicated region
    $region9: #{timepara_rnn_forward.1} parent=5 // pred_check
      _
    $region10: #{timepara_rnn_forward.1} parent=5 // pred_check_branch
      %232 = sbr.rel (%p229) target = $region12
    $region11: #{timepara_rnn_forward.1} parent=5 // pred_region
      %s233 = ssub.s32 %s15, 1
      // Predicated region
      $region13: #{timepara_rnn_forward.1} parent=11 // pred_check
        %p234 = pneg %p62
      $region14: #{timepara_rnn_forward.1} parent=11 // pred_check_branch
        %236 = sbr.rel (%p234) target = $region16
      $region15: #{timepara_rnn_forward.1} parent=11 // pred_region
        _
      $region16: #{timepara_rnn_forward.1} parent=11 // pred_fallthru
        _
      // Predicated region
      $region17: #{timepara_rnn_forward.1} parent=11 // pred_check
        %p237 = pneg %p83
      $region18: #{timepara_rnn_forward.1} parent=11 // pred_check_branch
        %239 = sbr.rel (%p237) target = $region20
      $region19: #{timepara_rnn_forward.1} parent=11 // pred_region
        _
      $region20: #{timepara_rnn_forward.1} parent=11 // pred_fallthru
        _
      // Predicated region
      $region21: #{timepara_rnn_forward.1} parent=11 // pred_check
        %p240 = pneg %p104
      $region22: #{timepara_rnn_forward.1} parent=11 // pred_check_branch
        %242 = sbr.rel (%p240) target = $region24
      $region23: #{timepara_rnn_forward.1} parent=11 // pred_region
        _
      $region24: #{timepara_rnn_forward.1} parent=11 // pred_fallthru
        _
      // Predicated region
      $region25: #{timepara_rnn_forward.1} parent=11 // pred_check
        %p243 = pneg %p125
      $region26: #{timepara_rnn_forward.1} parent=11 // pred_check_branch
        %245 = sbr.rel (%p243) target = $region28
      $region27: #{timepara_rnn_forward.1} parent=11 // pred_region
        _
      $region28: #{timepara_rnn_forward.1} parent=11 // pred_fallthru
        _
      // Predicated region
      $region29: #{timepara_rnn_forward.1} parent=11 // pred_check
        %p246 = pneg %p146
      $region30: #{timepara_rnn_forward.1} parent=11 // pred_check_branch
        %248 = sbr.rel (%p246) target = $region32
      $region31: #{timepara_rnn_forward.1} parent=11 // pred_region
        _
      $region32: #{timepara_rnn_forward.1} parent=11 // pred_fallthru
        _
      // Predicated region
      $region33: #{timepara_rnn_forward.1} parent=11 // pred_check
        %p249 = pneg %p167
      $region34: #{timepara_rnn_forward.1} parent=11 // pred_check_branch
        %251 = sbr.rel (%p249) target = $region36
      $region35: #{timepara_rnn_forward.1} parent=11 // pred_region
        _
      $region36: #{timepara_rnn_forward.1} parent=11 // pred_fallthru
        _
    $region12: #{timepara_rnn_forward.1} parent=5 // pred_fallthru
      _
    %p252 = scmp.lt.s32.totalorder %s15, 2
    // Predicated region
    $region37: #{timepara_rnn_forward.1} parent=5 // pred_check
      %p253 = pneg %p252
    $region38: #{timepara_rnn_forward.1} parent=5 // pred_check_branch
      %255 = sbr.rel (%p253) target = $region40
    $region39: #{timepara_rnn_forward.1} parent=5 // pred_region
      // Predicated region
      $region41: #{timepara_rnn_forward.1} parent=39 // pred_check
        %p256 = pneg %p35
      $region42: #{timepara_rnn_forward.1} parent=39 // pred_check_branch
        %258 = sbr.rel (%p256) target = $region44
      $region43: #{timepara_rnn_forward.1} parent=39 // pred_region
        %s259 = smul.u32 16, %s15
        %p260 = scmp.lt.s32.totalorder %s259, 31
        %s261 = scalar_select %p260, %s259, 31
        %s262 = smul.addr %s261, 8
        %s263 = scalar_lea.vmem %s0, %s262
        %s264 = smul.u32 16, %s15
      $region44: #{timepara_rnn_forward.1} parent=39 // pred_fallthru
        _
    $region40: #{timepara_rnn_forward.1} parent=5 // pred_fallthru
      _
    %p265 = scmp.le.s32.totalorder 1, %s15
    %p266 = scmp.lt.s32.totalorder %s15, 3
    %p267 = pnand %p265, %p266
    %p268 = pneg %p267
    // Predicated region
    $region45: #{timepara_rnn_forward.1} parent=5 // pred_check
      _
    $region46: #{timepara_rnn_forward.1} parent=5 // pred_check_branch
      %270 = sbr.rel (%p267) target = $region48
    $region47: #{timepara_rnn_forward.1} parent=5 // pred_region
      %s271 = ssub.s32 %s15, 1
      %s272 = smul.u32 16, %s20
      %p273 = scmp.lt.s32.totalorder %s272, 31
      %s274 = scalar_select %p273, %s272, 31
      %s275 = smul.addr %s274, 8
      %s276 = scalar_lea.vmem %s0, %s275
      %p277 = pneg %p41
      %p278 = pneg %p38
      %p279 = pneg %p62
      %p280 = pneg %p59
      %p281 = pneg %p83
      %p282 = pneg %p80
      %p283 = pneg %p104
      %p284 = pneg %p101
      %p285 = pneg %p125
      %p286 = pneg %p122
      %p287 = pneg %p146
      %p288 = pneg %p143
      %p289 = pneg %p167
      %p290 = pneg %p164
      %p291 = pneg %p193
      %p292 = pneg %p190
      %s293 = smul.u32 16, %s20
      %p294 = scmp.lt.s32.totalorder %s293, 31
      %s295 = scalar_select %p294, %s293, 31
      %s296 = smul.addr %s295, 8
      %s297 = scalar_lea.vmem %s7, %s296
      %p298 = pneg %p219
      %p299 = pneg %p216
      %s300 = smul.u32 16, %s20
      %p301 = scmp.lt.s32.totalorder %s300, 31
      %s302 = scalar_select %p301, %s300, 31
      %s303 = smul.addr %s302, 8
      %s304 = scalar_lea.vmem %s8, %s303
      %s305 = smul.u32 16, %s20
      %p306 = scmp.lt.s32.totalorder %s305, 31
      %s307 = scalar_select %p306, %s305, 31
      %s308 = smul.addr %s307, 8
      %s309 = scalar_lea.vmem %s0, %s308
      %s310 = smul.u32 16, %s20
      %s311 = smul.u32 16, %s20
      %p312 = scmp.lt.s32.totalorder %s311, 31
      %s313 = scalar_select %p312, %s311, 31
      %s314 = smul.addr %s313, 8
      %s315 = scalar_lea.vmem %s7, %s314
      %s316 = smul.u32 16, %s20
      %s317 = smul.u32 16, %s20
      %p318 = scmp.lt.s32.totalorder %s317, 31
      %s319 = scalar_select %p318, %s317, 31
      %s320 = smul.addr %s319, 8
      %s321 = scalar_lea.vmem %s8, %s320
      %s322 = smul.u32 16, %s20
      %v324 = vld [vmem:[%s309] sm:$0xff]
      %v325 = vld [vmem:[%s309 + $0x8] sm:$0xff]
      %v326 = vld [vmem:[%s309 + $0x10] sm:$0xff]
      %v327 = vld [vmem:[%s309 + $0x18] sm:$0xff]
      %v328 = vld [vmem:[%s309 + $0x20] sm:$0xff]
      %v329 = vld [vmem:[%s309 + $0x28] sm:$0xff]
      %v330 = vld [vmem:[%s309 + $0x30] sm:$0xff]
      %v331 = vld [vmem:[%s309 + $0x38] sm:$0xff]
      %v332 = vld [vmem:[%s309 + $0x40] sm:$0xff]
      %v333 = vld [vmem:[%s309 + $0x48] sm:$0xff]
      %v334 = vld [vmem:[%s309 + $0x50] sm:$0xff]
      %v335 = vld [vmem:[%s309 + $0x58] sm:$0xff]
      %v336 = vld [vmem:[%s309 + $0x60] sm:$0xff]
      %v337 = vld [vmem:[%s309 + $0x68] sm:$0xff]
      %v338 = vld [vmem:[%s309 + $0x70] sm:$0xff]
      %v339 = vld [vmem:[%s309 + $0x78] sm:$0xff]
      %v340 = vpack.c.bf16 %v325, %v324
      %v341 = vpack.c.bf16 %v327, %v326
      %v342 = vpack.c.bf16 %v329, %v328
      %v343 = vpack.c.bf16 %v331, %v330
      %v344 = vpack.c.bf16 %v333, %v332
      %v345 = vpack.c.bf16 %v335, %v334
      %v346 = vpack.c.bf16 %v337, %v336
      %v347 = vpack.c.bf16 %v339, %v338
      %v348 = vld [vmem:[%s1] sm:$0x3]
      %v349 = vld [vmem:[%s2] sm:$0x1]
      %v351 = vperm.slane %v349, 0
      %vm353 = vcmask 31744
      %v355 = vsel %vm353, %v340, 0
      %v358 = vsel %vm353, %v341, 0
      %v361 = vsel %vm353, %v342, 0
      %v364 = vsel %vm353, %v343, 0
      %v367 = vsel %vm353, %v344, 0
      %v370 = vsel %vm353, %v345, 0
      %v373 = vsel %vm353, %v346, 0
      %v376 = vsel %vm353, %v347, 0
      %vm378 = vcmask 1041408
      %v380 = vsel %vm378, %v348, 0
      %382 = vmatpush.bf16.msra.mxu0 0
      %383 = vmatpush.bf16.msra.mxu0 0
      %384 = vmatpush.bf16.msra.mxu0 0
      %385 = vmatpush.bf16.msra.mxu0 0
      %386 = vmatpush.bf16.msra.mxu0 0
      %387 = vmatpush.bf16.msra.mxu0 0
      %388 = vmatpush.bf16.msra.mxu0 0
      %389 = vmatpush.bf16.msra.mxu0 %v380
      %390 = vmatmul.bf16.gmra.mxu0 %v355
      %v391 = vpop.f32.mrf.mxu0
      %v392 = vadd.f32 %v351, %v391
      %v393 = vpop.f32.mrf.mxu0
      %v394 = vadd.f32 %v351, %v393
      %395 = vmatmul.bf16.gmra.mxu0 %v358
      %v396 = vpop.f32.mrf.mxu0
      %v397 = vadd.f32 %v351, %v396
      %v398 = vpop.f32.mrf.mxu0
      %v399 = vadd.f32 %v351, %v398
      %400 = vmatmul.bf16.gmra.mxu0 %v361
      %v401 = vpop.f32.mrf.mxu0
      %v402 = vadd.f32 %v351, %v401
      %v403 = vpop.f32.mrf.mxu0
      %v404 = vadd.f32 %v351, %v403
      %405 = vmatmul.bf16.gmra.mxu0 %v364
      %v406 = vpop.f32.mrf.mxu0
      %v407 = vadd.f32 %v351, %v406
      %v408 = vpop.f32.mrf.mxu0
      %v409 = vadd.f32 %v351, %v408
      %410 = vmatmul.bf16.gmra.mxu0 %v367
      %v411 = vpop.f32.mrf.mxu0
      %v412 = vadd.f32 %v351, %v411
      %v413 = vpop.f32.mrf.mxu0
      %v414 = vadd.f32 %v351, %v413
      %415 = vmatmul.bf16.gmra.mxu0 %v370
      %v416 = vpop.f32.mrf.mxu0
      %v417 = vadd.f32 %v351, %v416
      %v418 = vpop.f32.mrf.mxu0
      %v419 = vadd.f32 %v351, %v418
      %420 = vmatmul.bf16.gmra.mxu0 %v373
      %v421 = vpop.f32.mrf.mxu0
      %v422 = vadd.f32 %v351, %v421
      %v423 = vpop.f32.mrf.mxu0
      %v424 = vadd.f32 %v351, %v423
      %425 = vmatmul.bf16.gmra.mxu0 %v376
      %v426 = vpop.f32.mrf.mxu0
      %v427 = vadd.f32 %v351, %v426
      %v428 = vpop.f32.mrf.mxu0
      %v429 = vadd.f32 %v351, %v428
      %430 = vdwg.mxu0
      %v431 = vmax.f32 %v392, 0.0
      %v432 = vmax.f32 %v394, 0.0
      %v433 = vmax.f32 %v397, 0.0
      %v434 = vmax.f32 %v399, 0.0
      %v435 = vmax.f32 %v402, 0.0
      %v436 = vmax.f32 %v404, 0.0
      %v437 = vmax.f32 %v407, 0.0
      %v438 = vmax.f32 %v409, 0.0
      %v439 = vmax.f32 %v412, 0.0
      %v440 = vmax.f32 %v414, 0.0
      %v441 = vmax.f32 %v417, 0.0
      %v442 = vmax.f32 %v419, 0.0
      %v443 = vmax.f32 %v422, 0.0
      %v444 = vmax.f32 %v424, 0.0
      %v445 = vmax.f32 %v427, 0.0
      %v446 = vmax.f32 %v429, 0.0
      %v447 = vpack.c.bf16 %v432, %v431
      %v448 = vpack.c.bf16 %v434, %v433
      %v449 = vpack.c.bf16 %v436, %v435
      %v450 = vpack.c.bf16 %v438, %v437
      %v451 = vpack.c.bf16 %v440, %v439
      %v452 = vpack.c.bf16 %v442, %v441
      %v453 = vpack.c.bf16 %v444, %v443
      %v454 = vpack.c.bf16 %v446, %v445
      %v455 = vld [vmem:[%s3] sm:$0xf]
      %v456 = vld [vmem:[%s3 + $0x4] sm:$0xf]
      %v457 = vld [vmem:[%s3 + $0x8] sm:$0xf]
      %v458 = vld [vmem:[%s3 + $0xc] sm:$0xf]
      %v459 = vld [vmem:[%s3 + $0x10] sm:$0xf]
      %v460 = vld [vmem:[%s3 + $0x14] sm:$0xf]
      %v461 = vld [vmem:[%s3 + $0x18] sm:$0xf]
      %v462 = vld [vmem:[%s3 + $0x1c] sm:$0xf]
      %v463 = vld [vmem:[%s3 + $0x20] sm:$0xf]
      %v464 = vld [vmem:[%s3 + $0x24] sm:$0xf]
      %v465 = vld [vmem:[%s3 + $0x28] sm:$0xf]
      %v466 = vld [vmem:[%s3 + $0x2c] sm:$0xf]
      %v467 = vld [vmem:[%s3 + $0x30] sm:$0xf]
      %v468 = vld [vmem:[%s3 + $0x34] sm:$0xf]
      %v469 = vld [vmem:[%s3 + $0x38] sm:$0xf]
      %v470 = vld [vmem:[%s3 + $0x3c] sm:$0xf]
      %v471 = vld [vmem:[%s4] sm:$0x1]
      %v473 = vperm.slane %v471, 0
      %v491 = vunpack.c.l.b16 %v455
      %v492 = vunpack.c.l.b16 %v456
      %v493 = vunpack.c.l.b16 %v457
      %v494 = vunpack.c.l.b16 %v458
      %v495 = vunpack.c.l.b16 %v459
      %v496 = vunpack.c.l.b16 %v460
      %v497 = vunpack.c.l.b16 %v461
      %v498 = vunpack.c.l.b16 %v462
      %v499 = vunpack.c.l.b16 %v463
      %v500 = vunpack.c.l.b16 %v464
      %v501 = vunpack.c.l.b16 %v465
      %v502 = vunpack.c.l.b16 %v466
      %v503 = vunpack.c.l.b16 %v467
      %v504 = vunpack.c.l.b16 %v468
      %v505 = vunpack.c.l.b16 %v469
      %v506 = vunpack.c.l.b16 %v470
      %v507 = vpack.c.b16 %v492, %v491
      %v508 = vpack.c.b16 %v494, %v493
      %v509 = vpack.c.b16 %v496, %v495
      %v510 = vpack.c.b16 %v498, %v497
      %v511 = vpack.c.b16 %v500, %v499
      %v512 = vpack.c.b16 %v502, %v501
      %v513 = vpack.c.b16 %v504, %v503
      %v514 = vpack.c.b16 %v506, %v505
      %523 = vmatpush.bf16.msra.mxu0 %v514
      %524 = vmatpush.bf16.msra.mxu0 %v513
      %525 = vmatpush.bf16.msra.mxu0 %v512
      %526 = vmatpush.bf16.msra.mxu0 %v511
      %527 = vmatpush.bf16.msra.mxu0 %v510
      %528 = vmatpush.bf16.msra.mxu0 %v509
      %529 = vmatpush.bf16.msra.mxu0 %v508
      %530 = vmatpush.bf16.msra.mxu0 %v507
      %531 = vmatmul.bf16.gmra.mxu0 %v447
      %v532 = vpop.f32.mrf.mxu0
      %v533 = vadd.f32 %v473, %v532
      %v534 = vpop.f32.mrf.mxu0
      %v535 = vadd.f32 %v473, %v534
      %536 = vmatmul.bf16.gmra.mxu0 %v448
      %v537 = vpop.f32.mrf.mxu0
      %v538 = vadd.f32 %v473, %v537
      %v539 = vpop.f32.mrf.mxu0
      %v540 = vadd.f32 %v473, %v539
      %541 = vmatmul.bf16.gmra.mxu0 %v449
      %v542 = vpop.f32.mrf.mxu0
      %v543 = vadd.f32 %v473, %v542
      %v544 = vpop.f32.mrf.mxu0
      %v545 = vadd.f32 %v473, %v544
      %546 = vmatmul.bf16.gmra.mxu0 %v450
      %v547 = vpop.f32.mrf.mxu0
      %v548 = vadd.f32 %v473, %v547
      %v549 = vpop.f32.mrf.mxu0
      %v550 = vadd.f32 %v473, %v549
      %551 = vmatmul.bf16.gmra.mxu0 %v451
      %v552 = vpop.f32.mrf.mxu0
      %v553 = vadd.f32 %v473, %v552
      %v554 = vpop.f32.mrf.mxu0
      %v555 = vadd.f32 %v473, %v554
      %556 = vmatmul.bf16.gmra.mxu0 %v452
      %v557 = vpop.f32.mrf.mxu0
      %v558 = vadd.f32 %v473, %v557
      %v559 = vpop.f32.mrf.mxu0
      %v560 = vadd.f32 %v473, %v559
      %561 = vmatmul.bf16.gmra.mxu0 %v453
      %v562 = vpop.f32.mrf.mxu0
      %v563 = vadd.f32 %v473, %v562
      %v564 = vpop.f32.mrf.mxu0
      %v565 = vadd.f32 %v473, %v564
      %566 = vmatmul.bf16.gmra.mxu0 %v454
      %v567 = vpop.f32.mrf.mxu0
      %v568 = vadd.f32 %v473, %v567
      %v569 = vpop.f32.mrf.mxu0
      %v570 = vadd.f32 %v473, %v569
      %571 = vdwg.mxu0
      %v572 = vmax.f32 %v533, 0.0
      %v573 = vmax.f32 %v535, 0.0
      %v574 = vmax.f32 %v538, 0.0
      %v575 = vmax.f32 %v540, 0.0
      %v576 = vmax.f32 %v543, 0.0
      %v577 = vmax.f32 %v545, 0.0
      %v578 = vmax.f32 %v548, 0.0
      %v579 = vmax.f32 %v550, 0.0
      %v580 = vmax.f32 %v553, 0.0
      %v581 = vmax.f32 %v555, 0.0
      %v582 = vmax.f32 %v558, 0.0
      %v583 = vmax.f32 %v560, 0.0
      %v584 = vmax.f32 %v563, 0.0
      %v585 = vmax.f32 %v565, 0.0
      %v586 = vmax.f32 %v568, 0.0
      %v587 = vmax.f32 %v570, 0.0
      %v588 = vpack.c.bf16 %v573, %v572
      %v589 = vpack.c.bf16 %v575, %v574
      %v590 = vpack.c.bf16 %v577, %v576
      %v591 = vpack.c.bf16 %v579, %v578
      %v592 = vpack.c.bf16 %v581, %v580
      %v593 = vpack.c.bf16 %v583, %v582
      %v594 = vpack.c.bf16 %v585, %v584
      %v595 = vpack.c.bf16 %v587, %v586
      %v596 = vld [vmem:[%s5] sm:$0xf]
      %v597 = vld [vmem:[%s5 + $0x4] sm:$0xf]
      %v598 = vld [vmem:[%s5 + $0x8] sm:$0xf]
      %v599 = vld [vmem:[%s5 + $0xc] sm:$0xf]
      %v600 = vld [vmem:[%s5 + $0x10] sm:$0xf]
      %v601 = vld [vmem:[%s5 + $0x14] sm:$0xf]
      %v602 = vld [vmem:[%s5 + $0x18] sm:$0xf]
      %v603 = vld [vmem:[%s5 + $0x1c] sm:$0xf]
      %v604 = vld [vmem:[%s5 + $0x20] sm:$0xf]
      %v605 = vld [vmem:[%s5 + $0x24] sm:$0xf]
      %v606 = vld [vmem:[%s5 + $0x28] sm:$0xf]
      %v607 = vld [vmem:[%s5 + $0x2c] sm:$0xf]
      %v608 = vld [vmem:[%s5 + $0x30] sm:$0xf]
      %v609 = vld [vmem:[%s5 + $0x34] sm:$0xf]
      %v610 = vld [vmem:[%s5 + $0x38] sm:$0xf]
      %v611 = vld [vmem:[%s5 + $0x3c] sm:$0xf]
      %v612 = vld [vmem:[%s6] sm:$0x1]
      %v614 = vperm.slane %v612, 0
      %v632 = vunpack.c.l.b16 %v596
      %v633 = vunpack.c.l.b16 %v597
      %v634 = vunpack.c.l.b16 %v598
      %v635 = vunpack.c.l.b16 %v599
      %v636 = vunpack.c.l.b16 %v600
      %v637 = vunpack.c.l.b16 %v601
      %v638 = vunpack.c.l.b16 %v602
      %v639 = vunpack.c.l.b16 %v603
      %v640 = vunpack.c.l.b16 %v604
      %v641 = vunpack.c.l.b16 %v605
      %v642 = vunpack.c.l.b16 %v606
      %v643 = vunpack.c.l.b16 %v607
      %v644 = vunpack.c.l.b16 %v608
      %v645 = vunpack.c.l.b16 %v609
      %v646 = vunpack.c.l.b16 %v610
      %v647 = vunpack.c.l.b16 %v611
      %v648 = vpack.c.b16 %v633, %v632
      %v649 = vpack.c.b16 %v635, %v634
      %v650 = vpack.c.b16 %v637, %v636
      %v651 = vpack.c.b16 %v639, %v638
      %v652 = vpack.c.b16 %v641, %v640
      %v653 = vpack.c.b16 %v643, %v642
      %v654 = vpack.c.b16 %v645, %v644
      %v655 = vpack.c.b16 %v647, %v646
      %664 = vmatpush.bf16.msra.mxu0 %v655
      %665 = vmatpush.bf16.msra.mxu0 %v654
      %666 = vmatpush.bf16.msra.mxu0 %v653
      %667 = vmatpush.bf16.msra.mxu0 %v652
      %668 = vmatpush.bf16.msra.mxu0 %v651
      %669 = vmatpush.bf16.msra.mxu0 %v650
      %670 = vmatpush.bf16.msra.mxu0 %v649
      %671 = vmatpush.bf16.msra.mxu0 %v648
      %672 = vmatmul.bf16.gmra.mxu0 %v588
      %v673 = vpop.f32.mrf.mxu0
      %v674 = vadd.f32 %v614, %v673
      %v675 = vpop.f32.mrf.mxu0
      %v676 = vadd.f32 %v614, %v675
      %677 = vmatmul.bf16.gmra.mxu0 %v589
      %v678 = vpop.f32.mrf.mxu0
      %v679 = vadd.f32 %v614, %v678
      %v680 = vpop.f32.mrf.mxu0
      %v681 = vadd.f32 %v614, %v680
      %682 = vmatmul.bf16.gmra.mxu0 %v590
      %v683 = vpop.f32.mrf.mxu0
      %v684 = vadd.f32 %v614, %v683
      %v685 = vpop.f32.mrf.mxu0
      %v686 = vadd.f32 %v614, %v685
      %687 = vmatmul.bf16.gmra.mxu0 %v591
      %v688 = vpop.f32.mrf.mxu0
      %v689 = vadd.f32 %v614, %v688
      %v690 = vpop.f32.mrf.mxu0
      %v691 = vadd.f32 %v614, %v690
      %692 = vmatmul.bf16.gmra.mxu0 %v592
      %v693 = vpop.f32.mrf.mxu0
      %v694 = vadd.f32 %v614, %v693
      %v695 = vpop.f32.mrf.mxu0
      %v696 = vadd.f32 %v614, %v695
      %697 = vmatmul.bf16.gmra.mxu0 %v593
      %v698 = vpop.f32.mrf.mxu0
      %v699 = vadd.f32 %v614, %v698
      %v700 = vpop.f32.mrf.mxu0
      %v701 = vadd.f32 %v614, %v700
      %702 = vmatmul.bf16.gmra.mxu0 %v594
      %v703 = vpop.f32.mrf.mxu0
      %v704 = vadd.f32 %v614, %v703
      %v705 = vpop.f32.mrf.mxu0
      %v706 = vadd.f32 %v614, %v705
      %707 = vmatmul.bf16.gmra.mxu0 %v595
      %v708 = vpop.f32.mrf.mxu0
      %v709 = vadd.f32 %v614, %v708
      %v710 = vpop.f32.mrf.mxu0
      %v711 = vadd.f32 %v614, %v710
      %712 = vdwg.mxu0
      %v713 = vmul.f32 %v674, %v674
      %v714 = vmul.f32 %v676, %v676
      %v715 = vmul.f32 %v679, %v679
      %v716 = vmul.f32 %v681, %v681
      %v717 = vmul.f32 %v684, %v684
      %v718 = vmul.f32 %v686, %v686
      %v719 = vmul.f32 %v689, %v689
      %v720 = vmul.f32 %v691, %v691
      %v721 = vmul.f32 %v694, %v694
      %v722 = vmul.f32 %v696, %v696
      %v723 = vmul.f32 %v699, %v699
      %v724 = vmul.f32 %v701, %v701
      %v725 = vmul.f32 %v704, %v704
      %v726 = vmul.f32 %v706, %v706
      %v727 = vmul.f32 %v709, %v709
      %v728 = vmul.f32 %v711, %v711
      %v729 = vadd.f32 %v713, 1e-07
      %v730 = vadd.f32 %v714, 1e-07
      %v731 = vadd.f32 %v715, 1e-07
      %v732 = vadd.f32 %v716, 1e-07
      %v733 = vadd.f32 %v717, 1e-07
      %v734 = vadd.f32 %v718, 1e-07
      %v735 = vadd.f32 %v719, 1e-07
      %v736 = vadd.f32 %v720, 1e-07
      %v737 = vadd.f32 %v721, 1e-07
      %v738 = vadd.f32 %v722, 1e-07
      %v739 = vadd.f32 %v723, 1e-07
      %v740 = vadd.f32 %v724, 1e-07
      %v741 = vadd.f32 %v725, 1e-07
      %v742 = vadd.f32 %v726, 1e-07
      %v743 = vadd.f32 %v727, 1e-07
      %v744 = vadd.f32 %v728, 1e-07
      %vm745 = vcmask 130048
      %746 = vst.msk [vmem:[%s315] sm:$0xff] %vm745, %v729
      %747 = vst.msk [vmem:[%s315 + $0x8] sm:$0xff] %vm745, %v730
      %748 = vst.msk [vmem:[%s315 + $0x10] sm:$0xff] %vm745, %v731
      %749 = vst.msk [vmem:[%s315 + $0x18] sm:$0xff] %vm745, %v732
      %750 = vst.msk [vmem:[%s315 + $0x20] sm:$0xff] %vm745, %v733
      %751 = vst.msk [vmem:[%s315 + $0x28] sm:$0xff] %vm745, %v734
      %752 = vst.msk [vmem:[%s315 + $0x30] sm:$0xff] %vm745, %v735
      %753 = vst.msk [vmem:[%s315 + $0x38] sm:$0xff] %vm745, %v736
      %754 = vst.msk [vmem:[%s315 + $0x40] sm:$0xff] %vm745, %v737
      %755 = vst.msk [vmem:[%s315 + $0x48] sm:$0xff] %vm745, %v738
      %756 = vst.msk [vmem:[%s315 + $0x50] sm:$0xff] %vm745, %v739
      %757 = vst.msk [vmem:[%s315 + $0x58] sm:$0xff] %vm745, %v740
      %758 = vst.msk [vmem:[%s315 + $0x60] sm:$0xff] %vm745, %v741
      %759 = vst.msk [vmem:[%s315 + $0x68] sm:$0xff] %vm745, %v742
      %760 = vst.msk [vmem:[%s315 + $0x70] sm:$0xff] %vm745, %v743
      %761 = vst.msk [vmem:[%s315 + $0x78] sm:$0xff] %vm745, %v744
      %778 = vrot.lane.b32.xlu0 %v674, 112
      %v779 = vpop.permute.xlu0 %778
      %780 = vrot.lane.b32.xlu0 %v676, 112
      %v781 = vpop.permute.xlu0 %780
      %782 = vrot.lane.b32.xlu0 %v679, 112
      %v783 = vpop.permute.xlu0 %782
      %784 = vrot.lane.b32.xlu0 %v681, 112
      %v785 = vpop.permute.xlu0 %784
      %786 = vrot.lane.b32.xlu0 %v684, 112
      %v787 = vpop.permute.xlu0 %786
      %788 = vrot.lane.b32.xlu0 %v686, 112
      %v789 = vpop.permute.xlu0 %788
      %790 = vrot.lane.b32.xlu0 %v689, 112
      %v791 = vpop.permute.xlu0 %790
      %792 = vrot.lane.b32.xlu0 %v691, 112
      %v793 = vpop.permute.xlu0 %792
      %794 = vrot.lane.b32.xlu0 %v694, 112
      %v795 = vpop.permute.xlu0 %794
      %796 = vrot.lane.b32.xlu0 %v696, 112
      %v797 = vpop.permute.xlu0 %796
      %798 = vrot.lane.b32.xlu0 %v699, 112
      %v799 = vpop.permute.xlu0 %798
      %800 = vrot.lane.b32.xlu0 %v701, 112
      %v801 = vpop.permute.xlu0 %800
      %802 = vrot.lane.b32.xlu0 %v704, 112
      %v803 = vpop.permute.xlu0 %802
      %804 = vrot.lane.b32.xlu0 %v706, 112
      %v805 = vpop.permute.xlu0 %804
      %806 = vrot.lane.b32.xlu0 %v709, 112
      %v807 = vpop.permute.xlu0 %806
      %808 = vrot.lane.b32.xlu0 %v711, 112
      %v809 = vpop.permute.xlu0 %808
      %826 = vst.msk [vmem:[%s321] sm:$0xff] %vm745, %v779
      %827 = vst.msk [vmem:[%s321 + $0x8] sm:$0xff] %vm745, %v781
      %828 = vst.msk [vmem:[%s321 + $0x10] sm:$0xff] %vm745, %v783
      %829 = vst.msk [vmem:[%s321 + $0x18] sm:$0xff] %vm745, %v785
      %830 = vst.msk [vmem:[%s321 + $0x20] sm:$0xff] %vm745, %v787
      %831 = vst.msk [vmem:[%s321 + $0x28] sm:$0xff] %vm745, %v789
      %832 = vst.msk [vmem:[%s321 + $0x30] sm:$0xff] %vm745, %v791
      %833 = vst.msk [vmem:[%s321 + $0x38] sm:$0xff] %vm745, %v793
      %834 = vst.msk [vmem:[%s321 + $0x40] sm:$0xff] %vm745, %v795
      %835 = vst.msk [vmem:[%s321 + $0x48] sm:$0xff] %vm745, %v797
      %836 = vst.msk [vmem:[%s321 + $0x50] sm:$0xff] %vm745, %v799
      %837 = vst.msk [vmem:[%s321 + $0x58] sm:$0xff] %vm745, %v801
      %838 = vst.msk [vmem:[%s321 + $0x60] sm:$0xff] %vm745, %v803
      %839 = vst.msk [vmem:[%s321 + $0x68] sm:$0xff] %vm745, %v805
      %840 = vst.msk [vmem:[%s321 + $0x70] sm:$0xff] %vm745, %v807
      %841 = vst.msk [vmem:[%s321 + $0x78] sm:$0xff] %vm745, %v809
      %s842 = smul.u32 16, %s20
      %p843 = scmp.lt.s32.totalorder %s842, 31
      %s844 = scalar_select %p843, %s842, 31
      %s845 = smul.addr %s844, 8
      %s846 = scalar_lea.vmem %s7, %s845
      %s847 = smul.u32 16, %s20
      %p848 = scmp.lt.s32.totalorder %s847, 31
      %s849 = scalar_select %p848, %s847, 31
      %s850 = smul.addr %s849, 8
      %s851 = scalar_lea.vmem %s8, %s850
      // Predicated region
      $region49: #{timepara_rnn_forward.1} parent=47 // pred_check
        %p852 = pneg %p190
      $region50: #{timepara_rnn_forward.1} parent=47 // pred_check_branch
        %854 = sbr.rel (%p852) target = $region52
      $region51: #{timepara_rnn_forward.1} parent=47 // pred_region
        %s855 = smul.u32 16, %s20
      $region52: #{timepara_rnn_forward.1} parent=47 // pred_fallthru
        _
      // Predicated region
      $region53: #{timepara_rnn_forward.1} parent=47 // pred_check
        %p856 = pneg %p216
      $region54: #{timepara_rnn_forward.1} parent=47 // pred_check_branch
        %858 = sbr.rel (%p856) target = $region56
      $region55: #{timepara_rnn_forward.1} parent=47 // pred_region
        %s859 = smul.u32 16, %s20
      $region56: #{timepara_rnn_forward.1} parent=47 // pred_fallthru
        _
    $region48: #{timepara_rnn_forward.1} parent=5 // pred_fallthru
      _
    %p860 = scmp.le.s32.totalorder 2, %s15
    // Predicated region
    $region57: #{timepara_rnn_forward.1} parent=5 // pred_check
      %p861 = pneg %p860
    $region58: #{timepara_rnn_forward.1} parent=5 // pred_check_branch
      %863 = sbr.rel (%p861) target = $region60
    $region59: #{timepara_rnn_forward.1} parent=5 // pred_region
      %s864 = ssub.s32 %s15, 2
      // Predicated region
      $region61: #{timepara_rnn_forward.1} parent=59 // pred_check
        %p865 = pneg %p196
      $region62: #{timepara_rnn_forward.1} parent=59 // pred_check_branch
        %867 = sbr.rel (%p865) target = $region64
      $region63: #{timepara_rnn_forward.1} parent=59 // pred_region
        %s868 = smul.u32 16, %s21
        %p869 = scmp.lt.s32.totalorder %s868, 31
        %s870 = scalar_select %p869, %s868, 31
        %s871 = smul.addr %s870, 8
        %s872 = scalar_lea.vmem %s7, %s871
      $region64: #{timepara_rnn_forward.1} parent=59 // pred_fallthru
        _
      // Predicated region
      $region65: #{timepara_rnn_forward.1} parent=59 // pred_check
        %p873 = pneg %p222
      $region66: #{timepara_rnn_forward.1} parent=59 // pred_check_branch
        %875 = sbr.rel (%p873) target = $region68
      $region67: #{timepara_rnn_forward.1} parent=59 // pred_region
        %s876 = smul.u32 16, %s21
        %p877 = scmp.lt.s32.totalorder %s876, 31
        %s878 = scalar_select %p877, %s876, 31
        %s879 = smul.addr %s878, 8
        %s880 = scalar_lea.vmem %s8, %s879
      $region68: #{timepara_rnn_forward.1} parent=59 // pred_fallthru
        _
    $region60: #{timepara_rnn_forward.1} parent=5 // pred_fallthru
      _
  $region6: #{timepara_rnn_forward.1} parent=0 // loop_footer
    %s19 = sadd.s32 1, %s15
  $region7: #{timepara_rnn_forward.1} parent=0 // loop_footer_branch
    %14 = sbr.rel target = $region3
  $region8: #{timepara_rnn_forward.1} parent=0 // loop_exit
    _

</llo_original>
